<compile_context>
chip_gen: v6e
topology: v6e:2x2x1
jax: 0.10.0
libtpu: 0.0.40
codegen_flags: <defaults>
</compile_context>

<pallas_src>
import math

import jax
import jax.numpy as jnp
from jax.experimental import pallas as pl
from jax.experimental.pallas import tpu as pltpu


def _round_up(x: int, m: int) -> int:
    return ((x + m - 1) // m) * m


# ---------------------------------------------------------------------------
# EMA weights
# ---------------------------------------------------------------------------
def make_ema_matrix(T, context_window, dtype=jnp.float32):
    """Dense (T, T) matrix M with y = x @ M == the module's causal EMA."""
    a = 1.0 / context_window
    n = jnp.arange(T)[None, :]          # output time index
    j = jnp.arange(T)[:, None]          # input time index
    k = jnp.maximum(n - j, 0)
    w = a * (1.0 - a) ** k
    w = jnp.where(j <= n, w, 0.0)       # causal mask
    w = w.at[0, :].set((1.0 - a) ** jnp.arange(T))   # first column special case
    return w.astype(dtype)


def make_ema_band(tt, n_prev, context_window, dtype=jnp.float32):
    """Banded EMA blocks, shape ((n_prev+1)*3, tt, tt).

    For look-back k (input tile index = output tile index - k) there are
    three variants, selected per grid step inside the kernel:
      3k+0 : zeros        (look-back tile lies before t = 0)
      3k+1 : "first" tile (look-back tile is global tile 0; column j=0 special)
      3k+2 : generic band (coefficients a*(1-a)^(k*tt + c - r))
    """
    a = 1.0 / context_window
    r = jnp.arange(tt)[:, None]         # local input index inside look-back tile
    c = jnp.arange(tt)[None, :]         # local output index
    blocks = []
    for k in range(n_prev + 1):
        expo = k * tt + c - r
        w = a * (1.0 - a) ** jnp.maximum(expo, 0)
        w = jnp.where(expo >= 0, w, 0.0)               # only bites for k == 0
        w_first = w.at[0, :].set((1.0 - a) ** (k * tt + jnp.arange(tt)))
        blocks += [jnp.zeros((tt, tt), jnp.float32), w_first, w]
    return jnp.stack(blocks, axis=0).astype(dtype)


# ---------------------------------------------------------------------------
# Kernel
# ---------------------------------------------------------------------------
def _make_kernel(n_streams, compute_dtype):
    def kernel(*refs):
        x_refs = refs[:n_streams]                         # (Mb, tt) each, input dtype
        ema_ref, w1_ref, b1_ref, w2_ref, b2_ref, o_ref = refs[n_streams:]
        ti = pl.program_id(1)

        # Banded causal EMA: y = sum_k  x[tile ti-k] @ band_k   (MXU, f32 acc).
        x_gate = x_refs[0][...]                           # current tile, full precision
        e0 = ema_ref[jnp.clip(ti + 1, 0, 2)]              # k = 0 variant
        acc = jnp.dot(x_gate.astype(compute_dtype), e0,
                      preferred_element_type=jnp.float32)
        for k in range(1, n_streams):
            variant = jnp.clip(ti - k + 1, 0, 2)          # 0: zero, 1: first, 2: generic
            e = ema_ref[3 * k + variant]
            acc += jnp.dot(x_refs[k][...].astype(compute_dtype), e,
                           preferred_element_type=jnp.float32)

        # Squeeze: block-diagonal linear1 over the folded batch rows, + ReLU.
        h = jnp.dot(w1_ref[...], acc.astype(compute_dtype),
                    preferred_element_type=jnp.float32) + b1_ref[...]
        h = jnp.maximum(h, 0.0)
        # Excite: block-diagonal linear2, + sigmoid gate.
        g = jnp.dot(w2_ref[...], h.astype(compute_dtype),
                    preferred_element_type=jnp.float32) + b2_ref[...]
        g = jax.nn.sigmoid(g)

        # Gate the original (full-precision) input tile.
        o_ref[...] = (x_gate.astype(jnp.float32) * g).astype(o_ref.dtype)

    return kernel


# ---------------------------------------------------------------------------
# Tile / budget heuristics
# ---------------------------------------------------------------------------
def _vmem_capacity_bytes() -> int:
    try:
        info = pltpu.get_tpu_info()
        cap = getattr(info, "vmem_capacity_bytes", None)
        if cap:
            return int(cap)
    except Exception:
        pass
    return 64 * 1024 * 1024          # conservative (v7x-sized) fallback


def _valid_batch_tiles(B, C):
    """Divisors of B (descending) whose folded row count is 8-aligned (or full)."""
    out = []
    for bb in range(B, 0, -1):
        if B % bb:
            continue
        if (bb * C) % 8 == 0 or bb == B:
            out.append(bb)
    return out


def _x_index_map(k):
    def idx(bi, ti):
        return (bi, jnp.maximum(ti - k, 0))   # clamp; zero band variant nulls it
    return idx


# ---------------------------------------------------------------------------
# Wrapper
# ---------------------------------------------------------------------------
def causal_squeeze_excite_1d(x, w1, b1, w2, b2, context_window, *,
                             mxu_dtype=jnp.bfloat16,
                             batch_tile=None, time_tile=None,
                             lookback_tiles=None, interpret=False):
    """x: (B, C, T). w1: (Cs, C), b1: (Cs,), w2: (C, Cs), b2: (C,).

    Returns (B, C, T); same semantics as CausalSqueezeExcite1d.forward.
    """
    B, C, T = x.shape
    Cs, C_in = w1.shape
    assert C_in == C and w2.shape == (C, Cs)
    a = 1.0 / context_window
    ema_bytes = jnp.dtype(mxu_dtype).itemsize
    x_bytes = jnp.dtype(x.dtype).itemsize

    # Generation-aware VMEM limit (128 MiB on v5e/v6e, 64 MiB on v7x).
    vmem_cap = _vmem_capacity_bytes()
    vmem_limit = min(int(vmem_cap * 0.75), vmem_cap - 4 * 1024 * 1024)
    budget = int(vmem_limit * 0.8)

    # Time tile (multiple of 128 -> lane-dense stores) and padded length.
    if time_tile is not None:
        tt = int(time_tile)
    elif T >= 2048:
        tt = 512
    elif T >= 512:
        tt = 256
    else:
        tt = 128
    Tp = _round_up(T, tt)
    assert tt % 128 == 0 or Tp == tt
    nt = Tp // tt

    # Band width: keep EMA terms down to ~1e-6 relative weight.
    if lookback_tiles is not None:
        n_prev = int(lookback_tiles)
    elif context_window <= 1:
        n_prev = 0
    else:
        w_needed = int(math.ceil(math.log(1e-6) / math.log(1.0 - a)))
        n_prev = (w_needed + tt - 1) // tt
    n_prev = max(0, min(n_prev, nt - 1))
    n_streams = n_prev + 1

    # Batch tile: fold batch rows, target ~1024 MXU rows.
    valid_bbs = _valid_batch_tiles(B, C)
    if batch_tile is not None:
        bb = int(batch_tile)
        assert B % bb == 0 and ((bb * C) % 8 == 0 or bb == B)
    else:
        bb = None
        for cand in valid_bbs:                       # descending
            if cand * C <= max(1024, C):
                bb = cand
                break
        if bb is None:
            bb = valid_bbs[-1]

    def vmem_est(bb_, tt_):
        Mb_ = bb_ * C
        xblk = n_streams * 2 * Mb_ * tt_ * x_bytes        # double-buffered x streams
        oblk = 2 * Mb_ * tt_ * x_bytes                    # double-buffered output
        ema = 3 * n_streams * tt_ * tt_ * ema_bytes       # resident band
        wts = 2 * (bb_ * Cs) * (bb_ * C) * ema_bytes + (bb_ * Cs + bb_ * C) * 4
        inter = Mb_ * tt_ * 14                            # f32 acc/g + bf16 casts
        return xblk + oblk + ema + wts + inter

    if batch_tile is None:
        while vmem_est(bb, tt) > budget:
            smaller = [c for c in valid_bbs if c < bb]
            if not smaller:
                break
            bb = smaller[0]
    Mb = bb * C

    # Operands.
    ema_band = make_ema_band(tt, n_prev, context_window, jnp.float32).astype(mxu_dtype)
    eye = jnp.eye(bb, dtype=jnp.float32)
    w1_bd = jnp.kron(eye, w1.astype(jnp.float32)).astype(mxu_dtype)   # (bb*Cs, bb*C)
    w2_bd = jnp.kron(eye, w2.astype(jnp.float32)).astype(mxu_dtype)   # (bb*C, bb*Cs)
    b1_bd = jnp.tile(b1.astype(jnp.float32), bb).reshape(bb * Cs, 1)
    b2_bd = jnp.tile(b2.astype(jnp.float32), bb).reshape(bb * C, 1)

    x2 = x.reshape(B * C, T)
    if Tp > T:
        x2 = jnp.pad(x2, ((0, 0), (0, Tp - T)))           # right-pad (causal-safe)

    grid = (B // bb, nt)

    in_specs = [pl.BlockSpec((Mb, tt), _x_index_map(k)) for k in range(n_streams)]
    in_specs += [
        pl.BlockSpec(memory_space=pltpu.MemorySpace.VMEM),   # ema band (resident)
        pl.BlockSpec(memory_space=pltpu.MemorySpace.VMEM),   # w1_bd
        pl.BlockSpec(memory_space=pltpu.MemorySpace.VMEM),   # b1_bd
        pl.BlockSpec(memory_space=pltpu.MemorySpace.VMEM),   # w2_bd
        pl.BlockSpec(memory_space=pltpu.MemorySpace.VMEM),   # b2_bd
    ]
    out_spec = pl.BlockSpec((Mb, tt), lambda bi, ti: (bi, ti))

    grid_spec = pltpu.PrefetchScalarGridSpec(
        num_scalar_prefetch=0, grid=grid, in_specs=in_specs, out_specs=out_spec)

    flops = (2 * B * C * Tp * tt * n_streams          # banded EMA matmuls
             + 4 * B * Tp * bb * Cs * C)              # block-diagonal SE matmuls
    bytes_accessed = (n_streams * B * C * Tp * x_bytes
                      + B * C * Tp * x_bytes
                      + 3 * n_streams * tt * tt * ema_bytes
                      + 2 * (bb * Cs) * (bb * C) * ema_bytes)
    cost = pl.CostEstimate(flops=int(flops),
                           transcendentals=int(B * C * Tp),
                           bytes_accessed=int(bytes_accessed))

    out2 = pl.pallas_call(
        _make_kernel(n_streams, mxu_dtype),
        out_shape=jax.ShapeDtypeStruct((B * C, Tp), x.dtype),
        grid_spec=grid_spec,
        compiler_params=pltpu.CompilerParams(
            dimension_semantics=("parallel", "parallel"),
            vmem_limit_bytes=int(vmem_limit)),
        cost_estimate=cost,
        interpret=interpret,
    )(*([x2] * n_streams), ema_band, w1_bd, b1_bd, w2_bd, b2_bd)

    return out2[:, :T].reshape(B, C, T)


# ---------------------------------------------------------------------------
# Pure-JAX reference (module forward, training path)
# ---------------------------------------------------------------------------
def reference(x, w1, b1, w2, b2, context_window):
    hi = jax.lax.Precision.HIGHEST
    T = x.shape[-1]
    ema = make_ema_matrix(T, context_window, jnp.float32)
    y = jnp.einsum("bct,ts->bcs", x, ema, precision=hi)
    yt = jnp.transpose(y, (0, 2, 1))                                # (B, T, C)
    h = jax.nn.relu(jnp.matmul(yt, w1.T, precision=hi) + b1)
    g = jax.nn.sigmoid(jnp.matmul(h, w2.T, precision=hi) + b2)
    return x * jnp.transpose(g, (0, 2, 1))


if __name__ == "__main__":
    key = jax.random.PRNGKey(0)

    def run_case(B, C, T, reduction, context_window, **kw):
        Cs = max(1, C // reduction)
        ks = jax.random.split(jax.random.fold_in(key, 1000 * B + T), 5)
        x = jax.random.normal(ks[0], (B, C, T), dtype=jnp.float32)
        # PyTorch nn.Linear layout: weight is (out_features, in_features).
        w1 = jax.random.normal(ks[1], (Cs, C), dtype=jnp.float32) * 0.2
        b1 = jax.random.normal(ks[2], (Cs,), dtype=jnp.float32) * 0.1
        w2 = jax.random.normal(ks[3], (C, Cs), dtype=jnp.float32) * 0.2
        b2 = jax.random.normal(ks[4], (C,), dtype=jnp.float32) * 0.1

        out = causal_squeeze_excite_1d(x, w1, b1, w2, b2, context_window, **kw)
        out = jax.block_until_ready(out)
        assert out.shape == (B, C, T)

        ref = reference(x, w1, b1, w2, b2, context_window)
        max_err = float(jnp.max(jnp.abs(out - ref)))
        mean_err = float(jnp.mean(jnp.abs(out - ref)))
        assert jnp.allclose(out, ref, atol=5e-2, rtol=5e-2), \
            f"mismatch: max_err={max_err}"
        assert mean_err < 1e-2, f"mean error too large: {mean_err}"

    # Module defaults: channels=32, reduction=16 (c_squeeze=2), context_window=10.
    run_case(2, 32, 16, 16, 10)
    # Multi-tile path: time padding (300 -> 384), 3 time tiles, 2 look-back
    # streams (all band variants), and 2 batch tiles.
    run_case(4, 32, 300, 16, 10, batch_tile=2, time_tile=128)

    print("KERNEL_OK")
</pallas_src>

<mosaic_0001>
module attributes {stable_mosaic.version = 11 : i64} {
  func.func @kernel(%arg0: i32, %arg1: i32, %arg2: memref<64x128xf32, #tpu.memory_space<vmem>>, %arg3: memref<3x128x128xbf16, #tpu.memory_space<vmem>>, %arg4: memref<4x64xbf16, #tpu.memory_space<vmem>>, %arg5: memref<4x1xf32, #tpu.memory_space<vmem>>, %arg6: memref<64x4xbf16, #tpu.memory_space<vmem>>, %arg7: memref<64x1xf32, #tpu.memory_space<vmem>>, %arg8: memref<64x128xf32, #tpu.memory_space<vmem>>) attributes {dimension_semantics = [#tpu.dimension_semantics<parallel>, #tpu.dimension_semantics<parallel>], iteration_bounds = array<i64: 1, 1>, scalar_prefetch = 0 : i64, scratch_operands = 0 : i64, tpu.core_type = #tpu.core_type<tc>, window_params = [{transform_indices = @transform_0, window_bounds = array<i64: 64, 128>}, {pipeline_mode = #tpu.pipeline_mode<synchronous>, transform_indices = @transform_1, window_bounds = array<i64: 3, 128, 128>}, {pipeline_mode = #tpu.pipeline_mode<synchronous>, transform_indices = @transform_2, window_bounds = array<i64: 4, 64>}, {pipeline_mode = #tpu.pipeline_mode<synchronous>, transform_indices = @transform_3, window_bounds = array<i64: 4, 1>}, {pipeline_mode = #tpu.pipeline_mode<synchronous>, transform_indices = @transform_4, window_bounds = array<i64: 64, 4>}, {pipeline_mode = #tpu.pipeline_mode<synchronous>, transform_indices = @transform_5, window_bounds = array<i64: 64, 1>}, {transform_indices = @transform_6, window_bounds = array<i64: 64, 128>}]} {
    %c0 = arith.constant 0 : index
    %c0_0 = arith.constant 0 : index
    %0 = vector.load %arg2[%c0, %c0_0] : memref<64x128xf32, #tpu.memory_space<vmem>>, vector<64x128xf32>
    %c1_i32 = arith.constant 1 : i32
    %1 = arith.addi %arg1, %c1_i32 : i32
    %c0_i32 = arith.constant 0 : i32
    %c2_i32 = arith.constant 2 : i32
    %2 = arith.maxsi %c0_i32, %1 : i32
    %3 = arith.minsi %c2_i32, %2 : i32
    %4 = arith.index_cast %3 : i32 to index
    %c0_1 = arith.constant 0 : index
    %c0_2 = arith.constant 0 : index
    %5 = vector.load %arg3[%4, %c0_1, %c0_2] : memref<3x128x128xbf16, #tpu.memory_space<vmem>>, vector<1x128x128xbf16>
    %6 = vector.shape_cast %5 : vector<1x128x128xbf16> to vector<128x128xbf16>
    %7 = arith.truncf %0 : vector<64x128xf32> to vector<64x128xbf16>
    %cst = arith.constant dense<0.000000e+00> : vector<64x128xf32>
    %8 = tpu.matmul %7, %6, %cst {dimension_numbers = #tpu.dot_dimension_numbers<[1], [0], [0], [1], [0, 0, 1, 1], [], []>} : vector<64x128xbf16>, vector<128x128xbf16>, vector<64x128xf32> -> vector<64x128xf32>
    %c0_3 = arith.constant 0 : index
    %c0_4 = arith.constant 0 : index
    %9 = vector.load %arg4[%c0_3, %c0_4] : memref<4x64xbf16, #tpu.memory_space<vmem>>, vector<4x64xbf16>
    %10 = arith.truncf %8 : vector<64x128xf32> to vector<64x128xbf16>
    %cst_5 = arith.constant dense<0.000000e+00> : vector<4x128xf32>
    %11 = tpu.matmul %9, %10, %cst_5 {dimension_numbers = #tpu.dot_dimension_numbers<[1], [0], [0], [1], [0, 0, 1, 1], [], []>} : vector<4x64xbf16>, vector<64x128xbf16>, vector<4x128xf32> -> vector<4x128xf32>
    %c0_6 = arith.constant 0 : index
    %c0_7 = arith.constant 0 : index
    %12 = vector.load %arg5[%c0_6, %c0_7] : memref<4x1xf32, #tpu.memory_space<vmem>>, vector<4x1xf32>
    %13 = vector.broadcast %12 : vector<4x1xf32> to vector<4x128xf32>
    %14 = arith.addf %11, %13 : vector<4x128xf32>
    %cst_8 = arith.constant 0.000000e+00 : f32
    %15 = vector.broadcast %cst_8 : f32 to vector<4x128xf32>
    %16 = arith.maximumf %14, %15 : vector<4x128xf32>
    %c0_9 = arith.constant 0 : index
    %c0_10 = arith.constant 0 : index
    %17 = vector.load %arg6[%c0_9, %c0_10] : memref<64x4xbf16, #tpu.memory_space<vmem>>, vector<64x4xbf16>
    %18 = arith.truncf %16 : vector<4x128xf32> to vector<4x128xbf16>
    %cst_11 = arith.constant dense<0.000000e+00> : vector<64x128xf32>
    %19 = tpu.matmul %17, %18, %cst_11 {dimension_numbers = #tpu.dot_dimension_numbers<[1], [0], [0], [1], [0, 0, 1, 1], [], []>} : vector<64x4xbf16>, vector<4x128xbf16>, vector<64x128xf32> -> vector<64x128xf32>
    %c0_12 = arith.constant 0 : index
    %c0_13 = arith.constant 0 : index
    %20 = vector.load %arg7[%c0_12, %c0_13] : memref<64x1xf32, #tpu.memory_space<vmem>>, vector<64x1xf32>
    %21 = vector.broadcast %20 : vector<64x1xf32> to vector<64x128xf32>
    %22 = arith.addf %19, %21 : vector<64x128xf32>
    %23 = arith.negf %22 : vector<64x128xf32>
    %24 = math.exp %23 : vector<64x128xf32>
    %cst_14 = arith.constant 1.000000e+00 : f32
    %25 = vector.broadcast %cst_14 : f32 to vector<64x128xf32>
    %26 = arith.addf %25, %24 : vector<64x128xf32>
    %27 = arith.divf %25, %26 : vector<64x128xf32>
    %28 = arith.mulf %0, %27 : vector<64x128xf32>
    %c0_15 = arith.constant 0 : index
    %c0_16 = arith.constant 0 : index
    %29 = vector.load %arg8[%c0_15, %c0_16] : memref<64x128xf32, #tpu.memory_space<vmem>>, vector<64x128xf32>
    tpu.vector_store %arg8[%c0_15, %c0_16], %28 {strides = array<i32>} : memref<64x128xf32, #tpu.memory_space<vmem>>, vector<64x128xf32>,
    return
  }
  func.func @transform_0(%arg0: i32, %arg1: i32) -> (i32, i32) {
    %c0_i32 = arith.constant 0 : i32
    %0 = arith.subi %arg1, %c0_i32 : i32
    %c0_i32_0 = arith.constant 0 : i32
    %1 = arith.maxsi %0, %c0_i32_0 : i32
    %c0_i32_1 = arith.constant 0 : i32
    return %arg0, %1 : i32, i32
  }
  func.func @transform_1(%arg0: i32, %arg1: i32) -> (i32, i32, i32) {
    %c0_i32 = arith.constant 0 : i32
    %c0_i32_0 = arith.constant 0 : i32
    %c0_i32_1 = arith.constant 0 : i32
    %c0_i32_2 = arith.constant 0 : i32
    return %c0_i32, %c0_i32_0, %c0_i32_1 : i32, i32, i32
  }
  func.func @transform_2(%arg0: i32, %arg1: i32) -> (i32, i32) {
    %c0_i32 = arith.constant 0 : i32
    %c0_i32_0 = arith.constant 0 : i32
    %c0_i32_1 = arith.constant 0 : i32
    return %c0_i32, %c0_i32_0 : i32, i32
  }
  func.func @transform_3(%arg0: i32, %arg1: i32) -> (i32, i32) {
    %c0_i32 = arith.constant 0 : i32
    %c0_i32_0 = arith.constant 0 : i32
    %c0_i32_1 = arith.constant 0 : i32
    return %c0_i32, %c0_i32_0 : i32, i32
  }
  func.func @transform_4(%arg0: i32, %arg1: i32) -> (i32, i32) {
    %c0_i32 = arith.constant 0 : i32
    %c0_i32_0 = arith.constant 0 : i32
    %c0_i32_1 = arith.constant 0 : i32
    return %c0_i32, %c0_i32_0 : i32, i32
  }
  func.func @transform_5(%arg0: i32, %arg1: i32) -> (i32, i32) {
    %c0_i32 = arith.constant 0 : i32
    %c0_i32_0 = arith.constant 0 : i32
    %c0_i32_1 = arith.constant 0 : i32
    return %c0_i32, %c0_i32_0 : i32, i32
  }
  func.func @transform_6(%arg0: i32, %arg1: i32) -> (i32, i32) {
    %c0_i32 = arith.constant 0 : i32
    return %arg0, %arg1 : i32, i32
  }
}

</mosaic_0001>

<llo_original>
// kernel: tpu_custom_call.1
$region0: #{tpu_custom_call.1}
  #allocation0 [shape = 'u32[]', space=smem, size = 0x4, offset = 0x4, fixed_abs, tag = 'smem constant byte address 0x4 - core index']
  #allocation1 [shape = 'u32[144,128]{1,0:T(1,128)}', space=vmem, size = 0x12000, scoped, tag = 'internal scratch']
  %s0 = inlined_call_operand.vmem [shape: f32[64,128], index: 0, kind: input, shape index: {}]
  %s1 = inlined_call_operand.hbm [shape: bf16[3,128,128], index: 1, kind: input, shape index: {}]
  %s2 = inlined_call_operand.vmem [shape: bf16[4,64], index: 2, kind: input, shape index: {}]
  %s3 = inlined_call_operand.vmem [shape: f32[4,1], index: 3, kind: input, shape index: {}]
  %s4 = inlined_call_operand.vmem [shape: bf16[64,4], index: 4, kind: input, shape index: {}]
  %s5 = inlined_call_operand.vmem [shape: f32[64,1], index: 5, kind: input, shape index: {}]
  %s6 = inlined_call_operand.hbm [shape: f32[64,128], index: 6, kind: output, shape index: {}]
  %s7 = sld [smem:[#allocation0]]
  $region38: #{tpu_custom_call.1} parent=0
    _
  %s9 = ssub.s32 1, %s7
  %s10 = scalar_select 0, %s9, %s7
  $region1: #{tpu_custom_call.1} parent=0
    #allocation2 [shape = 'u8[98304]{0}', space=vmem, size = 0x18000, scoped, tag = 'input window, operand 1, single buffered']
    #allocation3 [shape = 's32[1]{0}', space=sflag, size = 0x4, scoped, tag = 'scoped memory for tpu_custom_call.1']
    #allocation4 [shape = 's32[1]{0}', space=sflag, size = 0x4, scoped, tag = 'scoped memory for tpu_custom_call.1']
    #allocation5 [shape = 'u8[32768]{0}', space=vmem, size = 0x8000, scoped, tag = 'output window, operand 0, single buffered']
    %11 = vsyncpa [#allocation3], 0
    %12 = vsyncpa [#allocation4], 0
    // Predicated region
    $region2: #{tpu_custom_call.1} parent=1 // pred_check
      _
    $region3: #{tpu_custom_call.1} parent=1 // pred_check_branch
      %14 = sbr.rel (0) target = $region5
    $region4: #{tpu_custom_call.1} parent=1 // pred_region
      _
    $region5: #{tpu_custom_call.1} parent=1 // pred_fallthru
      _
    // Predicated region
    $region6: #{tpu_custom_call.1} parent=1 // pred_check
      _
    $region7: #{tpu_custom_call.1} parent=1 // pred_check_branch
      %16 = sbr.rel (0) target = $region9
    $region8: #{tpu_custom_call.1} parent=1 // pred_region
      %s18 = ssub.s32 3072, 3072
      %19 = vsyncadd [#allocation3], %s18
      %s20 = sshll.u32 [#allocation2], 4
      %s21 = int_to_ptr.vmem [resolvable:$true] %s20
      %26 = dma.hbm_to_vmem [thread:$0]  %s1, 3072, %s21, [#allocation3], 64, 64, 4
    $region9: #{tpu_custom_call.1} parent=1 // pred_fallthru
      _
    // Predicated region
    $region10: #{tpu_custom_call.1} parent=1 // pred_check
      _
    $region11: #{tpu_custom_call.1} parent=1 // pred_check_branch
      %28 = sbr.rel (0) target = $region13
    $region12: #{tpu_custom_call.1} parent=1 // pred_region
      _
    $region13: #{tpu_custom_call.1} parent=1 // pred_fallthru
      _
    // Predicated region
    $region14: #{tpu_custom_call.1} parent=1 // pred_check
      _
    $region15: #{tpu_custom_call.1} parent=1 // pred_check_branch
      %30 = sbr.rel (0) target = $region17
    $region16: #{tpu_custom_call.1} parent=1 // pred_region
      _
    $region17: #{tpu_custom_call.1} parent=1 // pred_fallthru
      _
    // Predicated region
    $region18: #{tpu_custom_call.1} parent=1 // pred_check
      _
    $region19: #{tpu_custom_call.1} parent=1 // pred_check_branch
      %32 = sbr.rel (0) target = $region21
    $region20: #{tpu_custom_call.1} parent=1 // pred_region
      _
    $region21: #{tpu_custom_call.1} parent=1 // pred_fallthru
      _
    // Predicated region
    $region22: #{tpu_custom_call.1} parent=1 // pred_check
      _
    $region23: #{tpu_custom_call.1} parent=1 // pred_check_branch
      %34 = sbr.rel (0) target = $region25
    $region24: #{tpu_custom_call.1} parent=1 // pred_region
      _
    $region25: #{tpu_custom_call.1} parent=1 // pred_fallthru
      _
    // Predicated region
    $region26: #{tpu_custom_call.1} parent=1 // pred_check
      _
    $region27: #{tpu_custom_call.1} parent=1 // pred_check_branch
      %36 = sbr.rel (0) target = $region29
    $region28: #{tpu_custom_call.1} parent=1 // pred_region
      %37 = dma.done [#allocation3], 3072
    $region29: #{tpu_custom_call.1} parent=1 // pred_fallthru
      _
    %v39 = vld [vmem:[%s0] sm:$0xff]
    %v40 = vld [vmem:[%s0 + $0x8] sm:$0xff]
    %v41 = vld [vmem:[%s0 + $0x10] sm:$0xff]
    %v42 = vld [vmem:[%s0 + $0x18] sm:$0xff]
    %v43 = vld [vmem:[%s0 + $0x20] sm:$0xff]
    %v44 = vld [vmem:[%s0 + $0x28] sm:$0xff]
    %v45 = vld [vmem:[%s0 + $0x30] sm:$0xff]
    %v46 = vld [vmem:[%s0 + $0x38] sm:$0xff]
    %s47 = sadd.s32 0, 1
    %p48 = scmp.gt.s32.totalorder %s47, 0
    %s49 = scalar_select %p48, %s47, 0
    %p50 = scmp.lt.s32.totalorder %s49, 2
    %s51 = scalar_select %p50, %s49, 2
    %s52 = smul.u32 %s51, 16
    %s53 = smul.addr %s52, 4
    %s54 = scalar_lea.vmem [#allocation2], %s53
    %v55 = vld [vmem:[%s54] sm:$0xf]
    %v56 = vld [vmem:[%s54 + $0x4] sm:$0xf]
    %v57 = vld [vmem:[%s54 + $0x8] sm:$0xf]
    %v58 = vld [vmem:[%s54 + $0xc] sm:$0xf]
    %v59 = vld [vmem:[%s54 + $0x10] sm:$0xf]
    %v60 = vld [vmem:[%s54 + $0x14] sm:$0xf]
    %v61 = vld [vmem:[%s54 + $0x18] sm:$0xf]
    %v62 = vld [vmem:[%s54 + $0x1c] sm:$0xf]
    %v63 = vld [vmem:[%s54 + $0x20] sm:$0xf]
    %v64 = vld [vmem:[%s54 + $0x24] sm:$0xf]
    %v65 = vld [vmem:[%s54 + $0x28] sm:$0xf]
    %v66 = vld [vmem:[%s54 + $0x2c] sm:$0xf]
    %v67 = vld [vmem:[%s54 + $0x30] sm:$0xf]
    %v68 = vld [vmem:[%s54 + $0x34] sm:$0xf]
    %v69 = vld [vmem:[%s54 + $0x38] sm:$0xf]
    %v70 = vld [vmem:[%s54 + $0x3c] sm:$0xf]
    %v71 = vpack.c.bf16 %v40, %v39
    %v72 = vpack.c.bf16 %v42, %v41
    %v73 = vpack.c.bf16 %v44, %v43
    %v74 = vpack.c.bf16 %v46, %v45
    %v91 = vunpack.c.l.b16 %v55
    %v92 = vunpack.c.l.b16 %v56
    %v93 = vunpack.c.l.b16 %v57
    %v94 = vunpack.c.l.b16 %v58
    %v95 = vunpack.c.l.b16 %v59
    %v96 = vunpack.c.l.b16 %v60
    %v97 = vunpack.c.l.b16 %v61
    %v98 = vunpack.c.l.b16 %v62
    %v99 = vunpack.c.l.b16 %v63
    %v100 = vunpack.c.l.b16 %v64
    %v101 = vunpack.c.l.b16 %v65
    %v102 = vunpack.c.l.b16 %v66
    %v103 = vunpack.c.l.b16 %v67
    %v104 = vunpack.c.l.b16 %v68
    %v105 = vunpack.c.l.b16 %v69
    %v106 = vunpack.c.l.b16 %v70
    %v107 = vpack.c.b16 %v92, %v91
    %v108 = vpack.c.b16 %v94, %v93
    %v109 = vpack.c.b16 %v96, %v95
    %v110 = vpack.c.b16 %v98, %v97
    %v111 = vpack.c.b16 %v100, %v99
    %v112 = vpack.c.b16 %v102, %v101
    %v113 = vpack.c.b16 %v104, %v103
    %v114 = vpack.c.b16 %v106, %v105
    %123 = vmatprep.subr.bf16.mxu0 0
    %124 = vmatpush1.bf16.msra.mxu0 %v114
    %125 = vmatprep.subr.bf16.mxu0 0
    %126 = vmatpush1.bf16.msra.mxu0 %v113
    %127 = vmatprep.subr.bf16.mxu0 0
    %128 = vmatpush1.bf16.msra.mxu0 %v112
    %129 = vmatprep.subr.bf16.mxu0 0
    %130 = vmatpush1.bf16.msra.mxu0 %v111
    %131 = vmatprep.subr.bf16.mxu0 0
    %132 = vmatpush1.bf16.msra.mxu0 %v110
    %133 = vmatprep.subr.bf16.mxu0 0
    %134 = vmatpush1.bf16.msra.mxu0 %v109
    %135 = vmatprep.subr.bf16.mxu0 0
    %136 = vmatpush1.bf16.msra.mxu0 %v108
    %137 = vmatprep.subr.bf16.mxu0 0
    %138 = vmatpush1.bf16.msra.mxu0 %v107
    %139 = vmatprep.subr.bf16.mxu0 0
    %140 = vmatpush2.bf16.msra.mxu0 0
    %141 = vmatprep.subr.bf16.mxu0 0
    %142 = vmatpush2.bf16.msra.mxu0 0
    %143 = vmatprep.subr.bf16.mxu0 0
    %144 = vmatpush2.bf16.msra.mxu0 0
    %145 = vmatprep.subr.bf16.mxu0 0
    %146 = vmatpush2.bf16.msra.mxu0 0
    %147 = vmatprep.subr.bf16.mxu0 0
    %148 = vmatpush2.bf16.msra.mxu0 0
    %149 = vmatprep.subr.bf16.mxu0 0
    %150 = vmatpush2.bf16.msra.mxu0 0
    %151 = vmatprep.subr.bf16.mxu0 0
    %152 = vmatpush2.bf16.msra.mxu0 0
    %153 = vmatprep.subr.bf16.mxu0 0
    %154 = vmatpush2.bf16.msra.mxu0 0
    %155 = vmatprep.mubr.bf16.mxu0 0
    %156 = vmatmul.mubr.bf16.gmra.mxu0 %v71
    %v157 = vpop.f32.mrf.mxu0
    %v158 = vadd.f32 0.0, %v157
    %v159 = vpop.f32.mrf.mxu0
    %v160 = vpop.f32.mrf.mxu0
    %v161 = vadd.f32 0.0, %v160
    %v162 = vpop.f32.mrf.mxu0
    %163 = vmatprep.mubr.bf16.mxu0 0
    %164 = vmatmul.mubr.bf16.gmra.mxu0 %v72
    %v165 = vpop.f32.mrf.mxu0
    %v166 = vadd.f32 0.0, %v165
    %v167 = vpop.f32.mrf.mxu0
    %v168 = vpop.f32.mrf.mxu0
    %v169 = vadd.f32 0.0, %v168
    %v170 = vpop.f32.mrf.mxu0
    %171 = vmatprep.mubr.bf16.mxu0 0
    %172 = vmatmul.mubr.bf16.gmra.mxu0 %v73
    %v173 = vpop.f32.mrf.mxu0
    %v174 = vadd.f32 0.0, %v173
    %v175 = vpop.f32.mrf.mxu0
    %v176 = vpop.f32.mrf.mxu0
    %v177 = vadd.f32 0.0, %v176
    %v178 = vpop.f32.mrf.mxu0
    %179 = vmatprep.mubr.bf16.mxu0 0
    %180 = vmatmul.mubr.bf16.gmra.mxu0 %v74
    %v181 = vpop.f32.mrf.mxu0
    %v182 = vadd.f32 0.0, %v181
    %v183 = vpop.f32.mrf.mxu0
    %v184 = vpop.f32.mrf.mxu0
    %v185 = vadd.f32 0.0, %v184
    %v186 = vpop.f32.mrf.mxu0
    %187 = vdwg.mxu0
    %v188 = vld [vmem:[%s2] sm:$0x3]
    %v189 = vpack.c.bf16 %v161, %v158
    %v190 = vpack.c.bf16 %v169, %v166
    %v191 = vpack.c.bf16 %v177, %v174
    %v192 = vpack.c.bf16 %v185, %v182
    %v193 = vld [vmem:[%s3] sm:$0xf]
    %195 = vset.pattern.permute.xlu0 0
    %196 = vperm.xlu0 %195, %v193
    %v197 = vpop.permute.xlu0 %196
    %vm199 = vcmask 523264
    %v201 = vsel %vm199, %v188, 0
    %203 = vmatprep.subr.bf16.mxu0 0
    %204 = vmatpush1.bf16.msra.mxu0 0
    %205 = vmatprep.subr.bf16.mxu0 0
    %206 = vmatpush1.bf16.msra.mxu0 0
    %207 = vmatprep.subr.bf16.mxu0 0
    %208 = vmatpush1.bf16.msra.mxu0 0
    %209 = vmatprep.subr.bf16.mxu0 0
    %210 = vmatpush1.bf16.msra.mxu0 0
    %211 = vmatprep.subr.bf16.mxu0 0
    %212 = vmatpush1.bf16.msra.mxu0 %v192
    %213 = vmatprep.subr.bf16.mxu0 0
    %214 = vmatpush1.bf16.msra.mxu0 %v191
    %215 = vmatprep.subr.bf16.mxu0 0
    %216 = vmatpush1.bf16.msra.mxu0 %v190
    %217 = vmatprep.subr.bf16.mxu0 0
    %218 = vmatpush1.bf16.msra.mxu0 %v189
    %219 = vmatprep.subr.bf16.mxu0 0
    %220 = vmatpush2.bf16.msra.mxu0 0
    %221 = vmatprep.subr.bf16.mxu0 0
    %222 = vmatpush2.bf16.msra.mxu0 0
    %223 = vmatprep.subr.bf16.mxu0 0
    %224 = vmatpush2.bf16.msra.mxu0 0
    %225 = vmatprep.subr.bf16.mxu0 0
    %226 = vmatpush2.bf16.msra.mxu0 0
    %227 = vmatprep.subr.bf16.mxu0 0
    %228 = vmatpush2.bf16.msra.mxu0 0
    %229 = vmatprep.subr.bf16.mxu0 0
    %230 = vmatpush2.bf16.msra.mxu0 0
    %231 = vmatprep.subr.bf16.mxu0 0
    %232 = vmatpush2.bf16.msra.mxu0 0
    %233 = vmatprep.subr.bf16.mxu0 0
    %234 = vmatpush2.bf16.msra.mxu0 0
    %235 = vmatprep.mubr.bf16.mxu0 0
    %236 = vmatmul.mubr.bf16.gmra.mxu0 %v201
    %v237 = vpop.f32.mrf.mxu0
    %v238 = vadd.f32 %v197, %v237
    %v239 = vpop.f32.mrf.mxu0
    %v240 = vpop.f32.mrf.mxu0
    %v241 = vpop.f32.mrf.mxu0
    %242 = vdwg.mxu0
    %v243 = vmax.f32 %v238, 0.0
    %v244 = vld [vmem:[%s4] sm:$0xf]
    %v245 = vld [vmem:[%s4 + $0x4] sm:$0xf]
    %v246 = vld [vmem:[%s4 + $0x8] sm:$0xf]
    %v247 = vld [vmem:[%s4 + $0xc] sm:$0xf]
    %v248 = vld [vmem:[%s4 + $0x10] sm:$0xf]
    %v249 = vld [vmem:[%s4 + $0x14] sm:$0xf]
    %v250 = vld [vmem:[%s4 + $0x18] sm:$0xf]
    %v251 = vld [vmem:[%s4 + $0x1c] sm:$0xf]
    %v252 = vpack.c.bf16 %v243, %v243
    %v253 = vld [vmem:[%s5] sm:$0xff]
    %v254 = vld [vmem:[%s5 + $0x8] sm:$0xff]
    %v255 = vld [vmem:[%s5 + $0x10] sm:$0xff]
    %v256 = vld [vmem:[%s5 + $0x18] sm:$0xff]
    %v257 = vld [vmem:[%s5 + $0x20] sm:$0xff]
    %v258 = vld [vmem:[%s5 + $0x28] sm:$0xff]
    %v259 = vld [vmem:[%s5 + $0x30] sm:$0xff]
    %v260 = vld [vmem:[%s5 + $0x38] sm:$0xff]
    %262 = vset.pattern.permute.xlu0 0
    %263 = vperm.xlu0 %262, %v253
    %v264 = vpop.permute.xlu0 %263
    %267 = vset.pattern.permute.xlu0 0
    %268 = vperm.xlu0 %267, %v254
    %v269 = vpop.permute.xlu0 %268
    %272 = vset.pattern.permute.xlu0 0
    %273 = vperm.xlu0 %272, %v255
    %v274 = vpop.permute.xlu0 %273
    %277 = vset.pattern.permute.xlu0 0
    %278 = vperm.xlu0 %277, %v256
    %v279 = vpop.permute.xlu0 %278
    %282 = vset.pattern.permute.xlu0 0
    %283 = vperm.xlu0 %282, %v257
    %v284 = vpop.permute.xlu0 %283
    %287 = vset.pattern.permute.xlu0 0
    %288 = vperm.xlu0 %287, %v258
    %v289 = vpop.permute.xlu0 %288
    %292 = vset.pattern.permute.xlu0 0
    %293 = vperm.xlu0 %292, %v259
    %v294 = vpop.permute.xlu0 %293
    %297 = vset.pattern.permute.xlu0 0
    %298 = vperm.xlu0 %297, %v260
    %v299 = vpop.permute.xlu0 %298
    %v309 = vunpack.c.l.b16 %v244
    %v310 = vunpack.c.l.b16 %v245
    %v311 = vunpack.c.l.b16 %v246
    %v312 = vunpack.c.l.b16 %v247
    %v313 = vunpack.c.l.b16 %v248
    %v314 = vunpack.c.l.b16 %v249
    %v315 = vunpack.c.l.b16 %v250
    %v316 = vunpack.c.l.b16 %v251
    %v317 = vpack.c.b16 %v310, %v309
    %v318 = vpack.c.b16 %v312, %v311
    %v319 = vpack.c.b16 %v314, %v313
    %v320 = vpack.c.b16 %v316, %v315
    %vm321 = vcmask 31744
    %v323 = vsel %vm321, %v317, 0
    %v326 = vsel %vm321, %v318, 0
    %v329 = vsel %vm321, %v319, 0
    %v332 = vsel %vm321, %v320, 0
    %vm334 = vcmask 1041408
    %v336 = vsel %vm334, %v252, 0
    %338 = vmatprep.subr.bf16.mxu0 0
    %339 = vmatpush1.bf16.msra.mxu0 0
    %340 = vmatprep.subr.bf16.mxu0 0
    %341 = vmatpush1.bf16.msra.mxu0 0
    %342 = vmatprep.subr.bf16.mxu0 0
    %343 = vmatpush1.bf16.msra.mxu0 0
    %344 = vmatprep.subr.bf16.mxu0 0
    %345 = vmatpush1.bf16.msra.mxu0 0
    %346 = vmatprep.subr.bf16.mxu0 0
    %347 = vmatpush1.bf16.msra.mxu0 0
    %348 = vmatprep.subr.bf16.mxu0 0
    %349 = vmatpush1.bf16.msra.mxu0 0
    %350 = vmatprep.subr.bf16.mxu0 0
    %351 = vmatpush1.bf16.msra.mxu0 0
    %352 = vmatprep.subr.bf16.mxu0 0
    %353 = vmatpush1.bf16.msra.mxu0 %v336
    %354 = vmatprep.subr.bf16.mxu0 0
    %355 = vmatpush2.bf16.msra.mxu0 0
    %356 = vmatprep.subr.bf16.mxu0 0
    %357 = vmatpush2.bf16.msra.mxu0 0
    %358 = vmatprep.subr.bf16.mxu0 0
    %359 = vmatpush2.bf16.msra.mxu0 0
    %360 = vmatprep.subr.bf16.mxu0 0
    %361 = vmatpush2.bf16.msra.mxu0 0
    %362 = vmatprep.subr.bf16.mxu0 0
    %363 = vmatpush2.bf16.msra.mxu0 0
    %364 = vmatprep.subr.bf16.mxu0 0
    %365 = vmatpush2.bf16.msra.mxu0 0
    %366 = vmatprep.subr.bf16.mxu0 0
    %367 = vmatpush2.bf16.msra.mxu0 0
    %368 = vmatprep.subr.bf16.mxu0 0
    %369 = vmatpush2.bf16.msra.mxu0 0
    %370 = vmatprep.mubr.bf16.mxu0 0
    %371 = vmatmul.mubr.bf16.gmra.mxu0 %v323
    %v372 = vpop.f32.mrf.mxu0
    %v373 = vadd.f32 %v264, %v372
    %v374 = vpop.f32.mrf.mxu0
    %v375 = vpop.f32.mrf.mxu0
    %v376 = vadd.f32 %v269, %v375
    %v377 = vpop.f32.mrf.mxu0
    %378 = vmatprep.mubr.bf16.mxu0 0
    %379 = vmatmul.mubr.bf16.gmra.mxu0 %v326
    %v380 = vpop.f32.mrf.mxu0
    %v381 = vadd.f32 %v274, %v380
    %v382 = vpop.f32.mrf.mxu0
    %v383 = vpop.f32.mrf.mxu0
    %v384 = vadd.f32 %v279, %v383
    %v385 = vpop.f32.mrf.mxu0
    %386 = vmatprep.mubr.bf16.mxu0 0
    %387 = vmatmul.mubr.bf16.gmra.mxu0 %v329
    %v388 = vpop.f32.mrf.mxu0
    %v389 = vadd.f32 %v284, %v388
    %v390 = vpop.f32.mrf.mxu0
    %v391 = vpop.f32.mrf.mxu0
    %v392 = vadd.f32 %v289, %v391
    %v393 = vpop.f32.mrf.mxu0
    %394 = vmatprep.mubr.bf16.mxu0 0
    %395 = vmatmul.mubr.bf16.gmra.mxu0 %v332
    %v396 = vpop.f32.mrf.mxu0
    %v397 = vadd.f32 %v294, %v396
    %v398 = vpop.f32.mrf.mxu0
    %v399 = vpop.f32.mrf.mxu0
    %v400 = vadd.f32 %v299, %v399
    %v401 = vpop.f32.mrf.mxu0
    %402 = vdwg.mxu0
    %v403 = vxor.u32 %v373, 2147483648
    %v404 = vxor.u32 %v376, 2147483648
    %v405 = vxor.u32 %v381, 2147483648
    %v406 = vxor.u32 %v384, 2147483648
    %v407 = vxor.u32 %v389, 2147483648
    %v408 = vxor.u32 %v392, 2147483648
    %v409 = vxor.u32 %v397, 2147483648
    %v410 = vxor.u32 %v400, 2147483648
    %v411 = vmul.f32 %v403, 1.442695
    %v412 = vpow.pop %v411
    %v413 = vmul.f32 %v404, 1.442695
    %v414 = vpow.pop %v413
    %v415 = vmul.f32 %v405, 1.442695
    %v416 = vpow.pop %v415
    %v417 = vmul.f32 %v406, 1.442695
    %v418 = vpow.pop %v417
    %v419 = vmul.f32 %v407, 1.442695
    %v420 = vpow.pop %v419
    %v421 = vmul.f32 %v408, 1.442695
    %v422 = vpow.pop %v421
    %v423 = vmul.f32 %v409, 1.442695
    %v424 = vpow.pop %v423
    %v425 = vmul.f32 %v410, 1.442695
    %v426 = vpow.pop %v425
    %v427 = vadd.f32 %v412, 1.0
    %v428 = vadd.f32 %v414, 1.0
    %v429 = vadd.f32 %v416, 1.0
    %v430 = vadd.f32 %v418, 1.0
    %v431 = vadd.f32 %v420, 1.0
    %v432 = vadd.f32 %v422, 1.0
    %v433 = vadd.f32 %v424, 1.0
    %v434 = vadd.f32 %v426, 1.0
    %v435 = vrcp.pop %v427
    %v436 = vmul.f32 1.0, %v435
    %v437 = vrcp.pop %v428
    %v438 = vmul.f32 1.0, %v437
    %v439 = vrcp.pop %v429
    %v440 = vmul.f32 1.0, %v439
    %v441 = vrcp.pop %v430
    %v442 = vmul.f32 1.0, %v441
    %v443 = vrcp.pop %v431
    %v444 = vmul.f32 1.0, %v443
    %v445 = vrcp.pop %v432
    %v446 = vmul.f32 1.0, %v445
    %v447 = vrcp.pop %v433
    %v448 = vmul.f32 1.0, %v447
    %v449 = vrcp.pop %v434
    %v450 = vmul.f32 1.0, %v449
    %v451 = vmul.f32 %v39, %v436
    %v452 = vmul.f32 %v40, %v438
    %v453 = vmul.f32 %v41, %v440
    %v454 = vmul.f32 %v42, %v442
    %v455 = vmul.f32 %v43, %v444
    %v456 = vmul.f32 %v44, %v446
    %v457 = vmul.f32 %v45, %v448
    %v458 = vmul.f32 %v46, %v450
    %459 = vst [vmem:[#allocation5] sm:$0xff] %v451
    %460 = vst [vmem:[#allocation5 + $0x8] sm:$0xff] %v452
    %461 = vst [vmem:[#allocation5 + $0x10] sm:$0xff] %v453
    %462 = vst [vmem:[#allocation5 + $0x18] sm:$0xff] %v454
    %463 = vst [vmem:[#allocation5 + $0x20] sm:$0xff] %v455
    %464 = vst [vmem:[#allocation5 + $0x28] sm:$0xff] %v456
    %465 = vst [vmem:[#allocation5 + $0x30] sm:$0xff] %v457
    %466 = vst [vmem:[#allocation5 + $0x38] sm:$0xff] %v458
    // Predicated region
    $region30: #{tpu_custom_call.1} parent=1 // pred_check
      _
    $region31: #{tpu_custom_call.1} parent=1 // pred_check_branch
      %468 = sbr.rel (0) target = $region33
    $region32: #{tpu_custom_call.1} parent=1 // pred_region
      %s470 = ssub.s32 1024, 1024
      %471 = vsyncadd [#allocation4], %s470
      %s472 = sshll.u32 [#allocation5], 4
      %s473 = int_to_ptr.vmem [resolvable:$true] %s472
      %478 = dma.vmem_to_hbm [thread:$0]  %s473, 1024, %s6, [#allocation4], 128, 128, 8
    $region33: #{tpu_custom_call.1} parent=1 // pred_fallthru
      _
    // Predicated region
    $region34: #{tpu_custom_call.1} parent=1 // pred_check
      _
    $region35: #{tpu_custom_call.1} parent=1 // pred_check_branch
      %480 = sbr.rel (0) target = $region37
    $region36: #{tpu_custom_call.1} parent=1 // pred_region
      %481 = dma.done [#allocation4], 1024
    $region37: #{tpu_custom_call.1} parent=1 // pred_fallthru
      _
    %482 = vsyncpa [#allocation3], 1
    %483 = vsyncpa [#allocation4], 1

</llo_original>
